<compile_context>
chip_gen: v7x
topology: tpu7x:2x2x1
jax: 0.10.0
libtpu: 0.0.40
codegen_flags: <defaults>
</compile_context>

<pallas_src>
import jax
import jax.numpy as jnp
from jax.experimental import pallas as pl
from jax.experimental.pallas import tpu as pltpu

ACT_BITS = 8
WEIGHT_BITS = 8  # carried by the module but unused in forward (only activations are fake-quantized)
SPARSE_N = 4
SPARSE_M = 2


def _round_up(x: int, m: int) -> int:
    return (x + m - 1) // m * m


def mask_nxm(w_abs: jax.Array, n: int, m: int) -> jax.Array:
    """Row-wise N:M mask: in every group of `n` consecutive in_features keep the `m`
    entries with largest magnitude.  Returned as bool (cheap to store / stream)."""
    out_f, in_f = w_abs.shape
    groups = w_abs.reshape(out_f, in_f // n, n)
    order = jnp.argsort(groups, axis=-1)          # ascending
    ranks = jnp.argsort(order, axis=-1)           # rank of each element within its group
    return (ranks >= n - m).reshape(out_f, in_f)  # keep the m largest


def prepare_params(weight, bias, mask, compute_dtype=jnp.bfloat16):
    """One-time (per weight update) parameter prep — the analogue of the PyTorch module's
    in-place weight masking.  Applies the mask, casts to the MXU compute dtype, transposes
    to (K, N) so the kernel runs a canonical (tm,tk)x(tk,tn) dot, and pads K/N to the
    128-lane layout granule so the forward pass never copies the weights again."""
    out_f, in_f = weight.shape
    k_pad = _round_up(in_f, 128)
    n_pad = _round_up(out_f, 128)
    w_t = (weight * mask.astype(weight.dtype)).T.astype(compute_dtype)      # (K, N)
    w_t = jnp.pad(w_t, ((0, k_pad - in_f), (0, n_pad - out_f)))
    b = bias if bias is not None else jnp.zeros((out_f,), jnp.float32)
    b = jnp.pad(b.astype(jnp.float32), (0, n_pad - out_f)).reshape(1, n_pad)
    return w_t, b, out_f


def _fq_linear_kernel(scale_ref, q_ref, w_ref, b_ref, o_ref):
    """Grid = (M/tm, N/tn, K/tk); K innermost (reduction).

    scale_ref : SMEM (1,)   f32   per-tensor activation scale
    q_ref     : VMEM (tm,tk) bf16 pre-quantized activations (exact small integers)
    w_ref     : VMEM (tk,tn) bf16 masked weight, (K, N) layout
    b_ref     : VMEM (1, tn) f32  bias
    o_ref     : VMEM (tm,tn) f32  output block, used directly as the accumulator
    """
    k = pl.program_id(2)
    prod = jnp.dot(q_ref[...], w_ref[...], preferred_element_type=jnp.float32)

    @pl.when(k == 0)
    def _():
        o_ref[...] = prod            # first K block: direct write, no zero-init pass

    @pl.when(k > 0)
    def _():
        o_ref[...] += prod

    @pl.when(k == pl.num_programs(2) - 1)
    def _():
        # Undo the hoisted activation scale once per output tile, then add bias.
        o_ref[...] = o_ref[...] * scale_ref[0] + b_ref[...]


def _pick_tile_and_pad(dim: int, max_tile: int, granule: int):
    """Return (tile, padded_dim).  Prefer a tile that divides the granule-padded dim
    (no extra zero-padding / HBM copies); fall back to padding up to tile multiples
    only if the best divisor tile would be tiny."""
    dim_g = _round_up(dim, granule)
    limit = max(granule, (min(max_tile, dim_g) // granule) * granule)
    t = limit
    while dim_g % t != 0:
        t -= granule
    if t * 4 >= limit:
        return t, dim_g
    return limit, _round_up(dim_g, limit)


def masked_fakequant_linear(x, w_t, b2, out_features, *, act_bits=ACT_BITS,
                            compute_dtype=jnp.bfloat16, tm=256, tn=512, tk=1024):
    """Forward pass.  `w_t`, `b2` come from prepare_params (masked, (K,N) bf16, padded)."""
    leading = x.shape[:-1]
    in_f = x.shape[-1]
    x2 = x.reshape(-1, in_f)                      # keep input dtype: no extra f32 copy
    m_rows = x2.shape[0]

    # Per-tensor symmetric fake-quant scale (chunk_size=1 => one chunk).
    qmax = float(2 ** (act_bits - 1) - 1)
    amax = jnp.max(jnp.abs(x2)).astype(jnp.float32)
    scale = jnp.where(amax > 0, amax / qmax, jnp.float32(1.0))
    inv_scale = 1.0 / scale

    # Quantize once in the wrapper: integer values <= qmax are exact in bf16, so the
    # kernel streams half the activation bytes and never re-quantizes per N tile.
    q = jnp.clip(jnp.round(x2 * inv_scale), -qmax, qmax).astype(compute_dtype)

    k_in, n_in = w_t.shape
    m_gran = 16 if jnp.dtype(compute_dtype).itemsize == 2 else 8
    tm_e, m_pad = _pick_tile_and_pad(m_rows, tm, m_gran)
    tk_e, k_pad = _pick_tile_and_pad(k_in, tk, 128)
    tn_e, n_pad = _pick_tile_and_pad(n_in, tn, 128)

    # v7x megacore: if both parallel grid axes would have extent 1, split N so the second
    # TensorCore has work (single-core v5e/v6e are unaffected).
    if m_pad // tm_e == 1 and n_pad // tn_e == 1 and n_pad >= 256:
        tn_e, n_pad = _pick_tile_and_pad(n_in, n_pad // 2, 128)

    # Pads below are no-ops for layer sizes already on the 128/16 granule (common case);
    # any padded K columns/rows are zeros and thus neutral for the matmul.
    if q.shape != (m_pad, k_pad):
        q = jnp.pad(q, ((0, m_pad - m_rows), (0, k_pad - in_f)))
    if w_t.shape != (k_pad, n_pad):   # only when the fallback (non-divisor) padding triggers
        w_t = jnp.pad(w_t, ((0, k_pad - k_in), (0, n_pad - n_in)))
    if b2.shape != (1, n_pad):
        b2 = jnp.pad(b2, ((0, 0), (0, n_pad - b2.shape[1])))

    scale_arr = scale.reshape(1).astype(jnp.float32)
    grid = (m_pad // tm_e, n_pad // tn_e, k_pad // tk_e)

    out = pl.pallas_call(
        _fq_linear_kernel,
        out_shape=jax.ShapeDtypeStruct((m_pad, n_pad), jnp.float32),
        grid_spec=pltpu.PrefetchScalarGridSpec(
            num_scalar_prefetch=0,
            grid=grid,
            in_specs=[
                pl.BlockSpec(memory_space=pltpu.MemorySpace.SMEM),    # scale (1,)
                pl.BlockSpec((tm_e, tk_e), lambda i, j, k: (i, k)),   # q tile (bf16)
                pl.BlockSpec((tk_e, tn_e), lambda i, j, k: (k, j)),   # W^T tile (bf16, (K,N))
                pl.BlockSpec((1, tn_e), lambda i, j, k: (0, j)),      # bias tile
            ],
            out_specs=pl.BlockSpec((tm_e, tn_e), lambda i, j, k: (i, j)),
        ),
        compiler_params=pltpu.CompilerParams(
            dimension_semantics=("parallel", "parallel", "arbitrary")),
    )(scale_arr, q, w_t, b2)

    out = out[:m_rows, :out_features]
    return out.reshape(*leading, out_features)


if __name__ == "__main__":
    # Small shapes consistent with an FC layer on (batch, seq, hidden) activations.
    B, S, IN_F, OUT_F = 2, 8, 512, 256

    key = jax.random.PRNGKey(0)
    k_w, k_b, k_x = jax.random.split(key, 3)
    weight = jax.random.normal(k_w, (OUT_F, IN_F), dtype=jnp.float32)
    bias = jax.random.normal(k_b, (OUT_F,), dtype=jnp.float32)
    x = jax.random.normal(k_x, (B, S, IN_F), dtype=jnp.float32)

    # Mask computed once at "module instantiation" (as in the PyTorch __init__);
    # masked/cast/transposed weight prepared once (not re-materialized every forward).
    mask = mask_nxm(jnp.abs(weight), SPARSE_N, SPARSE_M)
    w_t, b2, out_f = prepare_params(weight, bias, mask)

    out = masked_fakequant_linear(x, w_t, b2, out_f)
    out = jax.block_until_ready(out)

    # ---- Pure-JAX references -------------------------------------------------
    qmax = float(2 ** (ACT_BITS - 1) - 1)
    amax = jnp.max(jnp.abs(x))
    scale = jnp.where(amax > 0, amax / qmax, jnp.float32(1.0))
    inv_scale = 1.0 / scale
    q_ref = jnp.clip(jnp.round(x * inv_scale), -qmax, qmax)
    w_masked = weight * mask

    # Exact f32 semantics of the PyTorch forward.
    ref_f32 = jnp.einsum("bsk,nk->bsn", q_ref * scale, w_masked) + bias
    # Reference mirroring the kernel's bf16 MXU operands (f32 accumulation).
    ref_bf16 = scale * jnp.einsum(
        "bsk,nk->bsn",
        q_ref.astype(jnp.bfloat16).astype(jnp.float32),
        w_masked.astype(jnp.bfloat16).astype(jnp.float32)) + bias

    assert out.shape == (B, S, OUT_F)
    # Tight check against the precision-mirrored reference.
    assert jnp.allclose(out, ref_bf16, atol=1e-2, rtol=1e-2), "mismatch vs bf16 reference"
    # Loose check against the full-f32 module semantics (bf16 weight cast only).
    rel_err = jnp.max(jnp.abs(out - ref_f32)) / jnp.max(jnp.abs(ref_f32))
    assert rel_err < 1e-2, f"relative error vs f32 reference too large: {rel_err}"
    print("KERNEL_OK")
</pallas_src>

<mosaic_0001>
module attributes {stable_mosaic.version = 11 : i64} {
  func.func @_fq_linear_kernel(%arg0: i32, %arg1: i32, %arg2: i32, %arg3: memref<1xf32, #tpu.memory_space<smem>>, %arg4: memref<16x512xbf16, #tpu.memory_space<vmem>>, %arg5: memref<512x128xbf16, #tpu.memory_space<vmem>>, %arg6: memref<1x128xf32, #tpu.memory_space<vmem>>, %arg7: memref<16x128xf32, #tpu.memory_space<vmem>>) attributes {dimension_semantics = [#tpu.dimension_semantics<parallel>, #tpu.dimension_semantics<parallel>, #tpu.dimension_semantics<arbitrary>], iteration_bounds = array<i64: 1, 2, 1>, scalar_prefetch = 0 : i64, scratch_operands = 0 : i64, tpu.core_type = #tpu.core_type<tc>, window_params = [{transform_indices = @transform_0, window_bounds = array<i64: 1>}, {transform_indices = @transform_1, window_bounds = array<i64: 16, 512>}, {transform_indices = @transform_2, window_bounds = array<i64: 512, 128>}, {transform_indices = @transform_3, window_bounds = array<i64: 1, 128>}, {transform_indices = @transform_4, window_bounds = array<i64: 16, 128>}]} {
    %c0 = arith.constant 0 : index
    %c0_0 = arith.constant 0 : index
    %0 = vector.load %arg4[%c0, %c0_0] : memref<16x512xbf16, #tpu.memory_space<vmem>>, vector<16x512xbf16>
    %c0_1 = arith.constant 0 : index
    %c0_2 = arith.constant 0 : index
    %1 = vector.load %arg5[%c0_1, %c0_2] : memref<512x128xbf16, #tpu.memory_space<vmem>>, vector<512x128xbf16>
    %cst = arith.constant dense<0.000000e+00> : vector<16x128xf32>
    %2 = tpu.matmul %0, %1, %cst {dimension_numbers = #tpu.dot_dimension_numbers<[1], [0], [0], [1], [0, 0, 1, 1], [], []>} : vector<16x512xbf16>, vector<512x128xbf16>, vector<16x128xf32> -> vector<16x128xf32>
    %c0_i32 = arith.constant 0 : i32
    %3 = arith.cmpi eq, %arg2, %c0_i32 : i32
    %4 = arith.extui %3 : i1 to i32
    %c0_i32_3 = arith.constant 0 : i32
    %5 = arith.cmpi ne, %4, %c0_i32_3 : i32
    scf.if %5 {
      %c0_8 = arith.constant 0 : index
      %c0_9 = arith.constant 0 : index
      %12 = vector.load %arg7[%c0_8, %c0_9] : memref<16x128xf32, #tpu.memory_space<vmem>>, vector<16x128xf32>
      tpu.vector_store %arg7[%c0_8, %c0_9], %2 {strides = array<i32>} : memref<16x128xf32, #tpu.memory_space<vmem>>, vector<16x128xf32>,
    } else {
    }
    %c0_i32_4 = arith.constant 0 : i32
    %6 = arith.cmpi sgt, %arg2, %c0_i32_4 : i32
    %7 = arith.extui %6 : i1 to i32
    %c0_i32_5 = arith.constant 0 : i32
    %8 = arith.cmpi ne, %7, %c0_i32_5 : i32
    scf.if %8 {
      %c0_8 = arith.constant 0 : index
      %c0_9 = arith.constant 0 : index
      %12 = vector.load %arg7[%c0_8, %c0_9] : memref<16x128xf32, #tpu.memory_space<vmem>>, vector<16x128xf32>
      %13 = arith.addf %12, %2 : vector<16x128xf32>
      %c0_10 = arith.constant 0 : index
      %c0_11 = arith.constant 0 : index
      %14 = vector.load %arg7[%c0_10, %c0_11] : memref<16x128xf32, #tpu.memory_space<vmem>>, vector<16x128xf32>
      tpu.vector_store %arg7[%c0_10, %c0_11], %13 {strides = array<i32>} : memref<16x128xf32, #tpu.memory_space<vmem>>, vector<16x128xf32>,
    } else {
    }
    %c0_i32_6 = arith.constant 0 : i32
    %9 = arith.cmpi eq, %arg2, %c0_i32_6 : i32
    %10 = arith.extui %9 : i1 to i32
    %c0_i32_7 = arith.constant 0 : i32
    %11 = arith.cmpi ne, %10, %c0_i32_7 : i32
    scf.if %11 {
      %c0_8 = arith.constant 0 : index
      %c0_9 = arith.constant 0 : index
      %12 = vector.load %arg7[%c0_8, %c0_9] : memref<16x128xf32, #tpu.memory_space<vmem>>, vector<16x128xf32>
      %c0_10 = arith.constant 0 : index
      %13 = memref.load %arg3[%c0_10] : memref<1xf32, #tpu.memory_space<smem>>
      %14 = vector.broadcast %13 : f32 to vector<16x128xf32>
      %15 = arith.mulf %12, %14 : vector<16x128xf32>
      %c0_11 = arith.constant 0 : index
      %c0_12 = arith.constant 0 : index
      %16 = vector.load %arg6[%c0_11, %c0_12] : memref<1x128xf32, #tpu.memory_space<vmem>>, vector<1x128xf32>
      %17 = vector.broadcast %16 : vector<1x128xf32> to vector<16x128xf32>
      %18 = arith.addf %15, %17 : vector<16x128xf32>
      %c0_13 = arith.constant 0 : index
      %c0_14 = arith.constant 0 : index
      %19 = vector.load %arg7[%c0_13, %c0_14] : memref<16x128xf32, #tpu.memory_space<vmem>>, vector<16x128xf32>
      tpu.vector_store %arg7[%c0_13, %c0_14], %18 {strides = array<i32>} : memref<16x128xf32, #tpu.memory_space<vmem>>, vector<16x128xf32>,
    } else {
    }
    return
  }
  func.func @transform_0(%arg0: i32, %arg1: i32, %arg2: i32) -> i32 {
    %c0_i32 = arith.constant 0 : i32
    %c0_i32_0 = arith.constant 0 : i32
    return %c0_i32 : i32
  }
  func.func @transform_1(%arg0: i32, %arg1: i32, %arg2: i32) -> (i32, i32) {
    %c0_i32 = arith.constant 0 : i32
    return %arg0, %arg2 : i32, i32
  }
  func.func @transform_2(%arg0: i32, %arg1: i32, %arg2: i32) -> (i32, i32) {
    %c0_i32 = arith.constant 0 : i32
    return %arg2, %arg1 : i32, i32
  }
  func.func @transform_3(%arg0: i32, %arg1: i32, %arg2: i32) -> (i32, i32) {
    %c0_i32 = arith.constant 0 : i32
    %c0_i32_0 = arith.constant 0 : i32
    return %c0_i32, %arg1 : i32, i32
  }
  func.func @transform_4(%arg0: i32, %arg1: i32, %arg2: i32) -> (i32, i32) {
    %c0_i32 = arith.constant 0 : i32
    return %arg0, %arg1 : i32, i32
  }
}

</mosaic_0001>

<llo_original>
// kernel: tpu_custom_call.1
$region0: #{tpu_custom_call.1}
  #allocation0 [shape = 'u32[]', space=smem, size = 0x4, offset = 0x4, fixed_abs, tag = 'smem constant byte address 0x4 - core index']
  #allocation1 [shape = 'u32[144,128]{1,0:T(1,128)}', space=vmem, size = 0x12000, scoped, tag = 'internal scratch']
  #allocation2 [shape = 'f32[1]{0:T(128)S(6)}', space=smem, size = 0x200, scoped, tag = 'scoped memory for tpu_custom_call.1']
  %s0 = inlined_call_operand.<no memory space> [shape: f32[1], index: 0, kind: input, shape index: {}]
  %s1 = inlined_call_operand.hbm [shape: bf16[16,512], index: 1, kind: input, shape index: {}]
  %s2 = inlined_call_operand.hbm [shape: bf16[512,256], index: 2, kind: input, shape index: {}]
  %s3 = inlined_call_operand.vmem [shape: f32[1,256], index: 3, kind: input, shape index: {}]
  %s4 = inlined_call_operand.hbm [shape: f32[16,256], index: 4, kind: output, shape index: {}]
  %s5 = sld [smem:[#allocation0]]
  $region69: #{tpu_custom_call.1} parent=0
    _
  %s7 = ssub.s32 1, %s5
  %s8 = scalar_select 0, %s7, %s5
  %9 = sst [smem:[#allocation2]] %s0
  $region1: #{tpu_custom_call.1} parent=0
    #allocation3 [shape = 'u8[16384]{0}', space=vmem, size = 0x4000, scoped, tag = 'input window, operand 1, single buffered']
    #allocation4 [shape = 's32[2]{0}', space=sflag, size = 0x8, scoped, tag = 'scoped memory for tpu_custom_call.1']
    #allocation5 [shape = 's32[2]{0}', space=sflag, size = 0x8, scoped, tag = 'scoped memory for tpu_custom_call.1']
    #allocation6 [shape = 'u8[262144]{0}', space=vmem, size = 0x40000, scoped, tag = 'input window, operand 2']
    #allocation7 [shape = 's32[2]{0}', space=sflag, size = 0x8, scoped, tag = 'scoped memory for tpu_custom_call.1']
    #allocation8 [shape = 'u8[16384]{0}', space=vmem, size = 0x4000, scoped, tag = 'output window, operand 0']
    %10 = vsyncpa [#allocation4], 0
    %11 = vsyncpa [#allocation7], 0
    %s12 = scalar_lea.sflag [#allocation7], 1
    %13 = vsyncpa %s12, 0
    %14 = vsyncpa [#allocation5], 0
    %s15 = scalar_lea.sflag [#allocation5], 1
    %16 = vsyncpa %s15, 0
    loop: start=0, step=1, limit=4
    $region2: #{tpu_custom_call.1} parent=1 // loop_pre_header
      _
    $region3: #{tpu_custom_call.1} parent=1 // loop_header
      %s18 = sphi 0, %s22
      %p19 = scmp.ge.s32.totalorder %s18, 4
      %s25 = sphi 0, %s44
      %s26 = sphi 0, %s40
      %s27 = sphi 0, %s36
      %s28 = sphi 0, %s25
      %s29 = sphi 0, %s26
      %s30 = sphi 0, %s27
      %s31 = sphi 0, %s28
      %s32 = sphi 0, %s29
      %s33 = sphi 0, %s30
      %s45 = sphi 0, %s45
      %s47 = sphi 0, %s45
      %s48 = sphi 0, %s47
      %s62 = sphi 0, %s48
      %s70 = sphi 0, %s72
      %s73 = sphi 0, %s70
      %s74 = sphi 0, %s73
      %s90 = sphi 0, %s74
      %s98 = sphi 0, %s100
      %s101 = sphi 0, %s98
      %s102 = sphi 0, %s101
      %s118 = sphi 0, %s102
      %s124 = sphi 0, %s126
      %s127 = sphi 0, %s124
      %s128 = sphi 0, %s127
      %s144 = sphi 0, %s128
      %s152 = sphi 0, %s154
      %s155 = sphi 0, %s152
      %s156 = sphi 0, %s155
      %s172 = sphi 0, %s156
    $region4: #{tpu_custom_call.1} parent=1 // loop_header_branch
      %21 = sbr.rel (%p19) target = $region8
    $region5: #{tpu_custom_call.1} parent=1 // loop_body
      %s23 = ssub.s32 %s18, 1
      %s24 = ssub.s32 %s18, 2
      %s34 = sadd.s32 1, %s27
      %p35 = scmp.ge.s32.totalorder %s34, 1
      %s36 = scalar_select %p35, 0, %s34
      %s37 = sadd.s32 1, %s26
      %s38 = scalar_select %p35, %s37, %s26
      %p39 = scmp.ge.s32.totalorder %s38, 2
      %s40 = scalar_select %p39, 0, %s38
      %s41 = sadd.s32 1, %s25
      %s42 = scalar_select %p39, %s41, %s25
      %p43 = scmp.ge.s32.totalorder %s42, 1
      %s44 = scalar_select %p43, 0, %s42
      %s46 = sadd.s32 %s45, 1
      %p49 = scmp.eq.s32.totalorder %s18, 1
      %p50 = scmp.ne.s32.totalorder %s45, %s47
      %p51 = scmp.eq.s32.totalorder %s18, 0
      %p52 = por %p50, %p51
      %p53 = scmp.ne.s32.totalorder %s45, %s47
      %p54 = scmp.eq.s32.totalorder %s23, 1
      %p55 = por %p53, %p54
      %p56 = scmp.ne.s32.totalorder %s47, %s48
      %p57 = scmp.eq.s32.totalorder %s23, 0
      %p58 = por %p56, %p57
      %p59 = scmp.ne.s32.totalorder %s47, %s48
      %p60 = scmp.eq.s32.totalorder %s24, 1
      %p61 = por %p59, %p60
      %p63 = scmp.ne.s32.totalorder %s48, %s62
      %p64 = scmp.eq.s32.totalorder %s24, 0
      %p65 = por %p63, %p64
      %s66 = ssub.s32 %s25, %s44
      %s67 = ssub.s32 %s27, %s36
      %s68 = sor.u32 %s66, %s67
      %p69 = scmp.eq.s32.totalorder %s68, 0
      %s71 = sadd.s32 %s70, 1
      %s72 = scalar_select %p69, %s70, %s71
      %p75 = pneg %p69
      %p76 = scmp.eq.s32.totalorder %s18, 1
      %p77 = por %p75, %p76
      %p78 = scmp.ne.s32.totalorder %s70, %s73
      %p79 = scmp.eq.s32.totalorder %s18, 0
      %p80 = por %p78, %p79
      %p81 = scmp.ne.s32.totalorder %s70, %s73
      %p82 = scmp.eq.s32.totalorder %s23, 1
      %p83 = por %p81, %p82
      %p84 = scmp.ne.s32.totalorder %s73, %s74
      %p85 = scmp.eq.s32.totalorder %s23, 0
      %p86 = por %p84, %p85
      %p87 = scmp.ne.s32.totalorder %s73, %s74
      %p88 = scmp.eq.s32.totalorder %s24, 1
      %p89 = por %p87, %p88
      %p91 = scmp.ne.s32.totalorder %s74, %s90
      %p92 = scmp.eq.s32.totalorder %s24, 0
      %p93 = por %p91, %p92
      %s94 = ssub.s32 %s27, %s36
      %s95 = ssub.s32 %s26, %s40
      %s96 = sor.u32 %s94, %s95
      %p97 = scmp.eq.s32.totalorder %s96, 0
      %s99 = sadd.s32 %s98, 1
      %s100 = scalar_select %p97, %s98, %s99
      %p103 = pneg %p97
      %p104 = scmp.eq.s32.totalorder %s18, 1
      %p105 = por %p103, %p104
      %p106 = scmp.ne.s32.totalorder %s98, %s101
      %p107 = scmp.eq.s32.totalorder %s18, 0
      %p108 = por %p106, %p107
      %p109 = scmp.ne.s32.totalorder %s98, %s101
      %p110 = scmp.eq.s32.totalorder %s23, 1
      %p111 = por %p109, %p110
      %p112 = scmp.ne.s32.totalorder %s101, %s102
      %p113 = scmp.eq.s32.totalorder %s23, 0
      %p114 = por %p112, %p113
      %p115 = scmp.ne.s32.totalorder %s101, %s102
      %p116 = scmp.eq.s32.totalorder %s24, 1
      %p117 = por %p115, %p116
      %p119 = scmp.ne.s32.totalorder %s102, %s118
      %p120 = scmp.eq.s32.totalorder %s24, 0
      %p121 = por %p119, %p120
      %s122 = ssub.s32 %s26, %s40
      %p123 = scmp.eq.s32.totalorder %s122, 0
      %s125 = sadd.s32 %s124, 1
      %s126 = scalar_select %p123, %s124, %s125
      %p129 = pneg %p123
      %p130 = scmp.eq.s32.totalorder %s18, 1
      %p131 = por %p129, %p130
      %p132 = scmp.ne.s32.totalorder %s124, %s127
      %p133 = scmp.eq.s32.totalorder %s18, 0
      %p134 = por %p132, %p133
      %p135 = scmp.ne.s32.totalorder %s124, %s127
      %p136 = scmp.eq.s32.totalorder %s23, 1
      %p137 = por %p135, %p136
      %p138 = scmp.ne.s32.totalorder %s127, %s128
      %p139 = scmp.eq.s32.totalorder %s23, 0
      %p140 = por %p138, %p139
      %p141 = scmp.ne.s32.totalorder %s127, %s128
      %p142 = scmp.eq.s32.totalorder %s24, 1
      %p143 = por %p141, %p142
      %p145 = scmp.ne.s32.totalorder %s128, %s144
      %p146 = scmp.eq.s32.totalorder %s24, 0
      %p147 = por %p145, %p146
      %s148 = ssub.s32 %s25, %s44
      %s149 = ssub.s32 %s26, %s40
      %s150 = sor.u32 %s148, %s149
      %p151 = scmp.eq.s32.totalorder %s150, 0
      %s153 = sadd.s32 %s152, 1
      %s154 = scalar_select %p151, %s152, %s153
      %p157 = pneg %p151
      %p158 = scmp.eq.s32.totalorder %s18, 1
      %p159 = por %p157, %p158
      %p160 = scmp.ne.s32.totalorder %s152, %s155
      %p161 = scmp.eq.s32.totalorder %s18, 0
      %p162 = por %p160, %p161
      %p163 = scmp.ne.s32.totalorder %s152, %s155
      %p164 = scmp.eq.s32.totalorder %s23, 1
      %p165 = por %p163, %p164
      %p166 = scmp.ne.s32.totalorder %s155, %s156
      %p167 = scmp.eq.s32.totalorder %s23, 0
      %p168 = por %p166, %p167
      %p169 = scmp.ne.s32.totalorder %s155, %s156
      %p170 = scmp.eq.s32.totalorder %s24, 1
      %p171 = por %p169, %p170
      %p173 = scmp.ne.s32.totalorder %s156, %s172
      %p174 = scmp.eq.s32.totalorder %s24, 0
      %p175 = por %p173, %p174
      %p176 = scmp.le.s32.totalorder 1, %s18
      %p177 = scmp.lt.s32.totalorder %s18, 3
      %p178 = pnand %p176, %p177
      %p179 = pneg %p178
      // Predicated region
      $region9: #{tpu_custom_call.1} parent=5 // pred_check
        _
      $region10: #{tpu_custom_call.1} parent=5 // pred_check_branch
        %181 = sbr.rel (%p178) target = $region12
      $region11: #{tpu_custom_call.1} parent=5 // pred_region
        %s182 = ssub.s32 %s18, 1
        // Predicated region
        $region13: #{tpu_custom_call.1} parent=11 // pred_check
          %p183 = pneg %p58
        $region14: #{tpu_custom_call.1} parent=11 // pred_check_branch
          %185 = sbr.rel (%p183) target = $region16
        $region15: #{tpu_custom_call.1} parent=11 // pred_region
          _
        $region16: #{tpu_custom_call.1} parent=11 // pred_fallthru
          _
        // Predicated region
        $region17: #{tpu_custom_call.1} parent=11 // pred_check
          %p186 = pneg %p86
        $region18: #{tpu_custom_call.1} parent=11 // pred_check_branch
          %188 = sbr.rel (%p186) target = $region20
        $region19: #{tpu_custom_call.1} parent=11 // pred_region
          %s189 = smul.u32 2, %s28
          %s190 = smul.u32 4, %s30
          %s192 = ssub.s32 512, 512
          %193 = vsyncadd [#allocation4], %s192
          %s194 = smul.addr %s189, 4
          %s195 = sadd.s32 %s190, %s194
          %s196 = smul.addr %s195, 64
          %s197 = scalar_lea.hbm %s1, %s196
          %s198 = sshll.u32 [#allocation3], 4
          %s199 = int_to_ptr.vmem [resolvable:$true] %s198
          %204 = dma.hbm_to_vmem [thread:$0]  %s197, 512, %s199, [#allocation4], 256, 256, 16
        $region20: #{tpu_custom_call.1} parent=11 // pred_fallthru
          _
      $region12: #{tpu_custom_call.1} parent=5 // pred_fallthru
        _
      %p205 = scmp.lt.s32.totalorder %s18, 2
      // Predicated region
      $region21: #{tpu_custom_call.1} parent=5 // pred_check
        %p206 = pneg %p205
      $region22: #{tpu_custom_call.1} parent=5 // pred_check_branch
        %208 = sbr.rel (%p206) target = $region24
      $region23: #{tpu_custom_call.1} parent=5 // pred_region
        // Predicated region
        $region25: #{tpu_custom_call.1} parent=23 // pred_check
          %p209 = pneg %p108
        $region26: #{tpu_custom_call.1} parent=23 // pred_check_branch
          %211 = sbr.rel (%p209) target = $region28
        $region27: #{tpu_custom_call.1} parent=23 // pred_region
          %s212 = sand.u32 %s98, 1
          %s213 = scalar_lea.sflag [#allocation7], %s212
          %s214 = sand.u32 %s98, 1
          %s215 = smul.addr %s214, 256
          %s216 = scalar_lea.vmem [#allocation6], %s215
          %s217 = smul.u32 64, %s27
          %s219 = ssub.s32 4096, 4096
          %220 = vsyncadd %s213, %s219
          %s221 = smul.addr %s217, 2
          %s222 = sadd.s32 %s26, %s221
          %s223 = smul.addr %s222, 64
          %s224 = scalar_lea.hbm %s2, %s223
          %s225 = sshll.u32 %s216, 4
          %s226 = int_to_ptr.vmem [resolvable:$true] %s225
          %231 = dma.hbm_to_vmem [thread:$0]  %s224, 4096, %s226, %s213, 128, 64, 4
        $region28: #{tpu_custom_call.1} parent=23 // pred_fallthru
          _
        // Predicated region
        $region29: #{tpu_custom_call.1} parent=23 // pred_check
          %p232 = pneg %p134
        $region30: #{tpu_custom_call.1} parent=23 // pred_check_branch
          %234 = sbr.rel (%p232) target = $region32
        $region31: #{tpu_custom_call.1} parent=23 // pred_region
          %p235 = scmp.lt.s32.totalorder %s26, 1
          %s236 = scalar_select %p235, %s26, 1
          %s237 = scalar_lea.vmem %s3, %s236
        $region32: #{tpu_custom_call.1} parent=23 // pred_fallthru
          _
      $region24: #{tpu_custom_call.1} parent=5 // pred_fallthru
        _
      %p238 = scmp.le.s32.totalorder 1, %s18
      %p239 = scmp.lt.s32.totalorder %s18, 3
      %p240 = pnand %p238, %p239
      %p241 = pneg %p240
      // Predicated region
      $region33: #{tpu_custom_call.1} parent=5 // pred_check
        _
      $region34: #{tpu_custom_call.1} parent=5 // pred_check_branch
        %243 = sbr.rel (%p240) target = $region36
      $region35: #{tpu_custom_call.1} parent=5 // pred_region
        %s244 = ssub.s32 %s18, 1
        // Predicated region
        $region37: #{tpu_custom_call.1} parent=35 // pred_check
          %p245 = pneg %p86
        $region38: #{tpu_custom_call.1} parent=35 // pred_check_branch
          %247 = sbr.rel (%p245) target = $region40
        $region39: #{tpu_custom_call.1} parent=35 // pred_region
          %248 = dma.done [#allocation4], 512
        $region40: #{tpu_custom_call.1} parent=35 // pred_fallthru
          _
        %s249 = sand.u32 %s101, 1
        %s250 = scalar_lea.sflag [#allocation7], %s249
        %s251 = sand.u32 %s101, 1
        %s252 = smul.addr %s251, 256
        %s253 = scalar_lea.vmem [#allocation6], %s252
        // Predicated region
        $region41: #{tpu_custom_call.1} parent=35 // pred_check
          %p254 = pneg %p114
        $region42: #{tpu_custom_call.1} parent=35 // pred_check_branch
          %256 = sbr.rel (%p254) target = $region44
        $region43: #{tpu_custom_call.1} parent=35 // pred_region
          %257 = dma.done %s250, 4096
        $region44: #{tpu_custom_call.1} parent=35 // pred_fallthru
          _
        %p258 = pneg %p58
        %p259 = pneg %p55
        %p260 = pneg %p86
        %p261 = pneg %p83
        %s262 = sand.u32 %s101, 1
        %s263 = scalar_lea.sflag [#allocation7], %s262
        %s264 = sand.u32 %s101, 1
        %s265 = smul.addr %s264, 256
        %s266 = scalar_lea.vmem [#allocation6], %s265
        %p267 = pneg %p114
        %p268 = pneg %p111
        %p269 = scmp.lt.s32.totalorder %s29, 1
        %s270 = scalar_select %p269, %s29, 1
        %s271 = scalar_lea.vmem %s3, %s270
        %p272 = pneg %p140
        %p273 = pneg %p137
        %p274 = pneg %p168
        %p275 = pneg %p165
        %s276 = sand.u32 %s155, 1
        %s277 = scalar_lea.sflag [#allocation5], %s276
        %s278 = sand.u32 %s155, 1
        %s279 = smul.addr %s278, 16
        %s280 = scalar_lea.vmem [#allocation8], %s279
        %s281 = smul.u32 2, %s28
        %s282 = smul.u32 4, %s30
        %s283 = smul.u32 64, %s30
        %p284 = scmp.lt.s32.totalorder %s29, 1
        %s285 = scalar_select %p284, %s29, 1
        %s286 = scalar_lea.vmem %s3, %s285
        %s287 = smul.u32 2, %s28
        %v289 = vld [vmem:[#allocation3] sm:$0xff]
        %v290 = vld [vmem:[#allocation3 + $0x8] sm:$0xff]
        %v291 = vld [vmem:[#allocation3 + $0x10] sm:$0xff]
        %v292 = vld [vmem:[#allocation3 + $0x18] sm:$0xff]
        %v293 = vld [vmem:[%s253] sm:$0xf]
        %v294 = vld [vmem:[%s253 + $0x4] sm:$0xf]
        %v295 = vld [vmem:[%s253 + $0x8] sm:$0xf]
        %v296 = vld [vmem:[%s253 + $0xc] sm:$0xf]
        %v297 = vld [vmem:[%s253 + $0x10] sm:$0xf]
        %v298 = vld [vmem:[%s253 + $0x14] sm:$0xf]
        %v299 = vld [vmem:[%s253 + $0x18] sm:$0xf]
        %v300 = vld [vmem:[%s253 + $0x1c] sm:$0xf]
        %v301 = vld [vmem:[%s253 + $0x20] sm:$0xf]
        %v302 = vld [vmem:[%s253 + $0x24] sm:$0xf]
        %v303 = vld [vmem:[%s253 + $0x28] sm:$0xf]
        %v304 = vld [vmem:[%s253 + $0x2c] sm:$0xf]
        %v305 = vld [vmem:[%s253 + $0x30] sm:$0xf]
        %v306 = vld [vmem:[%s253 + $0x34] sm:$0xf]
        %v307 = vld [vmem:[%s253 + $0x38] sm:$0xf]
        %v308 = vld [vmem:[%s253 + $0x3c] sm:$0xf]
        %v309 = vld [vmem:[%s253 + $0x40] sm:$0xf]
        %v310 = vld [vmem:[%s253 + $0x44] sm:$0xf]
        %v311 = vld [vmem:[%s253 + $0x48] sm:$0xf]
        %v312 = vld [vmem:[%s253 + $0x4c] sm:$0xf]
        %v313 = vld [vmem:[%s253 + $0x50] sm:$0xf]
        %v314 = vld [vmem:[%s253 + $0x54] sm:$0xf]
        %v315 = vld [vmem:[%s253 + $0x58] sm:$0xf]
        %v316 = vld [vmem:[%s253 + $0x5c] sm:$0xf]
        %v317 = vld [vmem:[%s253 + $0x60] sm:$0xf]
        %v318 = vld [vmem:[%s253 + $0x64] sm:$0xf]
        %v319 = vld [vmem:[%s253 + $0x68] sm:$0xf]
        %v320 = vld [vmem:[%s253 + $0x6c] sm:$0xf]
        %v321 = vld [vmem:[%s253 + $0x70] sm:$0xf]
        %v322 = vld [vmem:[%s253 + $0x74] sm:$0xf]
        %v323 = vld [vmem:[%s253 + $0x78] sm:$0xf]
        %v324 = vld [vmem:[%s253 + $0x7c] sm:$0xf]
        %v325 = vld [vmem:[%s253 + $0x80] sm:$0xf]
        %v326 = vld [vmem:[%s253 + $0x84] sm:$0xf]
        %v327 = vld [vmem:[%s253 + $0x88] sm:$0xf]
        %v328 = vld [vmem:[%s253 + $0x8c] sm:$0xf]
        %v329 = vld [vmem:[%s253 + $0x90] sm:$0xf]
        %v330 = vld [vmem:[%s253 + $0x94] sm:$0xf]
        %v331 = vld [vmem:[%s253 + $0x98] sm:$0xf]
        %v332 = vld [vmem:[%s253 + $0x9c] sm:$0xf]
        %v333 = vld [vmem:[%s253 + $0xa0] sm:$0xf]
        %v334 = vld [vmem:[%s253 + $0xa4] sm:$0xf]
        %v335 = vld [vmem:[%s253 + $0xa8] sm:$0xf]
        %v336 = vld [vmem:[%s253 + $0xac] sm:$0xf]
        %v337 = vld [vmem:[%s253 + $0xb0] sm:$0xf]
        %v338 = vld [vmem:[%s253 + $0xb4] sm:$0xf]
        %v339 = vld [vmem:[%s253 + $0xb8] sm:$0xf]
        %v340 = vld [vmem:[%s253 + $0xbc] sm:$0xf]
        %v341 = vld [vmem:[%s253 + $0xc0] sm:$0xf]
        %v342 = vld [vmem:[%s253 + $0xc4] sm:$0xf]
        %v343 = vld [vmem:[%s253 + $0xc8] sm:$0xf]
        %v344 = vld [vmem:[%s253 + $0xcc] sm:$0xf]
        %v345 = vld [vmem:[%s253 + $0xd0] sm:$0xf]
        %v346 = vld [vmem:[%s253 + $0xd4] sm:$0xf]
        %v347 = vld [vmem:[%s253 + $0xd8] sm:$0xf]
        %v348 = vld [vmem:[%s253 + $0xdc] sm:$0xf]
        %v349 = vld [vmem:[%s253 + $0xe0] sm:$0xf]
        %v350 = vld [vmem:[%s253 + $0xe4] sm:$0xf]
        %v351 = vld [vmem:[%s253 + $0xe8] sm:$0xf]
        %v352 = vld [vmem:[%s253 + $0xec] sm:$0xf]
        %v353 = vld [vmem:[%s253 + $0xf0] sm:$0xf]
        %v354 = vld [vmem:[%s253 + $0xf4] sm:$0xf]
        %v355 = vld [vmem:[%s253 + $0xf8] sm:$0xf]
        %v356 = vld [vmem:[%s253 + $0xfc] sm:$0xf]
        %v361 = vunpack.c.l.b16 %v289
        %v362 = vunpack.c.h.b16 %v289
        %v363 = vunpack.c.l.b16 %v290
        %v364 = vunpack.c.h.b16 %v290
        %v365 = vunpack.c.l.b16 %v291
        %v366 = vunpack.c.h.b16 %v291
        %v367 = vunpack.c.l.b16 %v292
        %v368 = vunpack.c.h.b16 %v292
        %v369 = vpack.c.b16 %v365, %v361
        %v370 = vpack.c.b16 %v366, %v362
        %v371 = vpack.c.b16 %v367, %v363
        %v372 = vpack.c.b16 %v368, %v364
        %v441 = vunpack.c.l.b16 %v293
        %v442 = vunpack.c.l.b16 %v294
        %v443 = vunpack.c.l.b16 %v295
        %v444 = vunpack.c.l.b16 %v296
        %v445 = vunpack.c.l.b16 %v297
        %v446 = vunpack.c.l.b16 %v298
        %v447 = vunpack.c.l.b16 %v299
        %v448 = vunpack.c.l.b16 %v300
        %v449 = vunpack.c.l.b16 %v301
        %v450 = vunpack.c.l.b16 %v302
        %v451 = vunpack.c.l.b16 %v303
        %v452 = vunpack.c.l.b16 %v304
        %v453 = vunpack.c.l.b16 %v305
        %v454 = vunpack.c.l.b16 %v306
        %v455 = vunpack.c.l.b16 %v307
        %v456 = vunpack.c.l.b16 %v308
        %v457 = vunpack.c.l.b16 %v309
        %v458 = vunpack.c.l.b16 %v310
        %v459 = vunpack.c.l.b16 %v311
        %v460 = vunpack.c.l.b16 %v312
        %v461 = vunpack.c.l.b16 %v313
        %v462 = vunpack.c.l.b16 %v314
        %v463 = vunpack.c.l.b16 %v315
        %v464 = vunpack.c.l.b16 %v316
        %v465 = vunpack.c.l.b16 %v317
        %v466 = vunpack.c.l.b16 %v318
        %v467 = vunpack.c.l.b16 %v319
        %v468 = vunpack.c.l.b16 %v320
        %v469 = vunpack.c.l.b16 %v321
        %v470 = vunpack.c.l.b16 %v322
        %v471 = vunpack.c.l.b16 %v323
        %v472 = vunpack.c.l.b16 %v324
        %v473 = vunpack.c.l.b16 %v325
        %v474 = vunpack.c.l.b16 %v326
        %v475 = vunpack.c.l.b16 %v327
        %v476 = vunpack.c.l.b16 %v328
        %v477 = vunpack.c.l.b16 %v329
        %v478 = vunpack.c.l.b16 %v330
        %v479 = vunpack.c.l.b16 %v331
        %v480 = vunpack.c.l.b16 %v332
        %v481 = vunpack.c.l.b16 %v333
        %v482 = vunpack.c.l.b16 %v334
        %v483 = vunpack.c.l.b16 %v335
        %v484 = vunpack.c.l.b16 %v336
        %v485 = vunpack.c.l.b16 %v337
        %v486 = vunpack.c.l.b16 %v338
        %v487 = vunpack.c.l.b16 %v339
        %v488 = vunpack.c.l.b16 %v340
        %v489 = vunpack.c.l.b16 %v341
        %v490 = vunpack.c.l.b16 %v342
        %v491 = vunpack.c.l.b16 %v343
        %v492 = vunpack.c.l.b16 %v344
        %v493 = vunpack.c.l.b16 %v345
        %v494 = vunpack.c.l.b16 %v346
        %v495 = vunpack.c.l.b16 %v347
        %v496 = vunpack.c.l.b16 %v348
        %v497 = vunpack.c.l.b16 %v349
        %v498 = vunpack.c.l.b16 %v350
        %v499 = vunpack.c.l.b16 %v351
        %v500 = vunpack.c.l.b16 %v352
        %v501 = vunpack.c.l.b16 %v353
        %v502 = vunpack.c.l.b16 %v354
        %v503 = vunpack.c.l.b16 %v355
        %v504 = vunpack.c.l.b16 %v356
        %v505 = vpack.c.b16 %v442, %v441
        %v506 = vpack.c.b16 %v444, %v443
        %v507 = vpack.c.b16 %v446, %v445
        %v508 = vpack.c.b16 %v448, %v447
        %v509 = vpack.c.b16 %v450, %v449
        %v510 = vpack.c.b16 %v452, %v451
        %v511 = vpack.c.b16 %v454, %v453
        %v512 = vpack.c.b16 %v456, %v455
        %v513 = vpack.c.b16 %v458, %v457
        %v514 = vpack.c.b16 %v460, %v459
        %v515 = vpack.c.b16 %v462, %v461
        %v516 = vpack.c.b16 %v464, %v463
        %v517 = vpack.c.b16 %v466, %v465
        %v518 = vpack.c.b16 %v468, %v467
        %v519 = vpack.c.b16 %v470, %v469
        %v520 = vpack.c.b16 %v472, %v471
        %v521 = vpack.c.b16 %v474, %v473
        %v522 = vpack.c.b16 %v476, %v475
        %v523 = vpack.c.b16 %v478, %v477
        %v524 = vpack.c.b16 %v480, %v479
        %v525 = vpack.c.b16 %v482, %v481
        %v526 = vpack.c.b16 %v484, %v483
        %v527 = vpack.c.b16 %v486, %v485
        %v528 = vpack.c.b16 %v488, %v487
        %v529 = vpack.c.b16 %v490, %v489
        %v530 = vpack.c.b16 %v492, %v491
        %v531 = vpack.c.b16 %v494, %v493
        %v532 = vpack.c.b16 %v496, %v495
        %v533 = vpack.c.b16 %v498, %v497
        %v534 = vpack.c.b16 %v500, %v499
        %v535 = vpack.c.b16 %v502, %v501
        %v536 = vpack.c.b16 %v504, %v503
        %569 = vmatprep.subr.bf16.mxu0 0
        %570 = vmatpush1.bf16.msra.mxu0 %v505
        %571 = vmatprep.subr.bf16.mxu0 0
        %572 = vmatpush1.bf16.msra.mxu0 %v506
        %573 = vmatprep.subr.bf16.mxu0 0
        %574 = vmatpush1.bf16.msra.mxu0 %v507
        %575 = vmatprep.subr.bf16.mxu0 0
        %576 = vmatpush1.bf16.msra.mxu0 %v508
        %577 = vmatprep.subr.bf16.mxu0 0
        %578 = vmatpush1.bf16.msra.mxu0 %v509
        %579 = vmatprep.subr.bf16.mxu0 0
        %580 = vmatpush1.bf16.msra.mxu0 %v510
        %581 = vmatprep.subr.bf16.mxu0 0
        %582 = vmatpush1.bf16.msra.mxu0 %v511
        %583 = vmatprep.subr.bf16.mxu0 0
        %584 = vmatpush1.bf16.msra.mxu0 %v512
        %585 = vmatprep.subr.bf16.mxu0 0
        %586 = vmatpush1.bf16.msra.mxu0 %v513
        %587 = vmatprep.subr.bf16.mxu0 0
        %588 = vmatpush1.bf16.msra.mxu0 %v514
        %589 = vmatprep.subr.bf16.mxu0 0
        %590 = vmatpush1.bf16.msra.mxu0 %v515
        %591 = vmatprep.subr.bf16.mxu0 0
        %592 = vmatpush1.bf16.msra.mxu0 %v516
        %593 = vmatprep.subr.bf16.mxu0 0
        %594 = vmatpush1.bf16.msra.mxu0 %v517
        %595 = vmatprep.subr.bf16.mxu0 0
        %596 = vmatpush1.bf16.msra.mxu0 %v518
        %597 = vmatprep.subr.bf16.mxu0 0
        %598 = vmatpush1.bf16.msra.mxu0 %v519
        %599 = vmatprep.subr.bf16.mxu0 0
        %600 = vmatpush1.bf16.msra.mxu0 %v520
        %601 = vmatprep.mubr.bf16.mxu0 %v370
        %602 = vmatmul.mubr.bf16.gmra.mrb[0].mxu0 %v369
        %v603 = vpop.f32.mrb[0].mxu0
        %v604 = vadd.f32 0.0, %v603
        %v605 = vpop.f32.mrb[0].mxu0
        %v606 = vpop.f32.mrb[0].mxu0
        %v607 = vadd.f32 0.0, %v606
        %v608 = vpop.f32.mrb[0].mxu0
        %609 = vdwg.mxu0
        %610 = vmatprep.subr.bf16.mxu0 0
        %611 = vmatpush1.bf16.msra.mxu0 %v521
        %612 = vmatprep.subr.bf16.mxu0 0
        %613 = vmatpush1.bf16.msra.mxu0 %v522
        %614 = vmatprep.subr.bf16.mxu0 0
        %615 = vmatpush1.bf16.msra.mxu0 %v523
        %616 = vmatprep.subr.bf16.mxu0 0
        %617 = vmatpush1.bf16.msra.mxu0 %v524
        %618 = vmatprep.subr.bf16.mxu0 0
        %619 = vmatpush1.bf16.msra.mxu0 %v525
        %620 = vmatprep.subr.bf16.mxu0 0
        %621 = vmatpush1.bf16.msra.mxu0 %v526
        %622 = vmatprep.subr.bf16.mxu0 0
        %623 = vmatpush1.bf16.msra.mxu0 %v527
        %624 = vmatprep.subr.bf16.mxu0 0
        %625 = vmatpush1.bf16.msra.mxu0 %v528
        %626 = vmatprep.subr.bf16.mxu0 0
        %627 = vmatpush1.bf16.msra.mxu0 %v529
        %628 = vmatprep.subr.bf16.mxu0 0
        %629 = vmatpush1.bf16.msra.mxu0 %v530
        %630 = vmatprep.subr.bf16.mxu0 0
        %631 = vmatpush1.bf16.msra.mxu0 %v531
        %632 = vmatprep.subr.bf16.mxu0 0
        %633 = vmatpush1.bf16.msra.mxu0 %v532
        %634 = vmatprep.subr.bf16.mxu0 0
        %635 = vmatpush1.bf16.msra.mxu0 %v533
        %636 = vmatprep.subr.bf16.mxu0 0
        %637 = vmatpush1.bf16.msra.mxu0 %v534
        %638 = vmatprep.subr.bf16.mxu0 0
        %639 = vmatpush1.bf16.msra.mxu0 %v535
        %640 = vmatprep.subr.bf16.mxu0 0
        %641 = vmatpush1.bf16.msra.mxu0 %v536
        %642 = vmatprep.mubr.bf16.mxu0 %v372
        %643 = vmatmul.mubr.bf16.gmra.mrb[0].mxu0 %v371
        %v644 = vpop.f32.mrb[0].mxu0
        %v645 = vadd.f32 %v604, %v644
        %v646 = vpop.f32.mrb[0].mxu0
        %v647 = vpop.f32.mrb[0].mxu0
        %v648 = vadd.f32 %v607, %v647
        %v649 = vpop.f32.mrb[0].mxu0
        %650 = vdwg.mxu0
        %p651 = scmp.eq.s32.totalorder %s30, 0
        // Predicated region
        $region45: #{tpu_custom_call.1} parent=35 // pred_check
          %p652 = pneg %p651
        $region46: #{tpu_custom_call.1} parent=35 // pred_check_branch
          %654 = sbr.rel (%p652) target = $region48
        $region47: #{tpu_custom_call.1} parent=35 // pred_region
          %655 = vst [vmem:[%s280] sm:$0xff] %v645
          %656 = vst [vmem:[%s280 + $0x8] sm:$0xff] %v648
        $region48: #{tpu_custom_call.1} parent=35 // pred_fallthru
          _
        %p657 = scmp.gt.s32.totalorder %s30, 0
        // Predicated region
        $region49: #{tpu_custom_call.1} parent=35 // pred_check
          %p658 = pneg %p657
        $region50: #{tpu_custom_call.1} parent=35 // pred_check_branch
          %660 = sbr.rel (%p658) target = $region52
        $region51: #{tpu_custom_call.1} parent=35 // pred_region
          %v661 = vld [vmem:[%s280] sm:$0xff]
          %v662 = vld [vmem:[%s280 + $0x8] sm:$0xff]
          %v663 = vadd.f32 %v661, %v645
          %v664 = vadd.f32 %v662, %v648
          %665 = vst [vmem:[%s280] sm:$0xff] %v663
          %666 = vst [vmem:[%s280 + $0x8] sm:$0xff] %v664
        $region52: #{tpu_custom_call.1} parent=35 // pred_fallthru
          _
        // Predicated region
        $region53: #{tpu_custom_call.1} parent=35 // pred_check
          %p667 = pneg %p651
        $region54: #{tpu_custom_call.1} parent=35 // pred_check_branch
          %669 = sbr.rel (%p667) target = $region56
        $region55: #{tpu_custom_call.1} parent=35 // pred_region
          %v670 = vld [vmem:[%s280] sm:$0xff]
          %v671 = vld [vmem:[%s280 + $0x8] sm:$0xff]
          %s672 = sld [smem:[#allocation2]]
          %v673 = vstv %s672
          %v674 = vmul.f32 %v670, %v673
          %v675 = vmul.f32 %v671, %v673
          %v676 = vld [vmem:[%s286] sm:$0x1]
          %v678 = vlaneseq
          %v679 = vshrl.u32 %v678, 7
          %v680 = vsub.s32 0, %v679
          %v681 = vrot.slane %v676, %v680
          %v683 = vadd.f32 %v674, %v681
          %v684 = vadd.f32 %v675, %v681
          %685 = vst [vmem:[%s280] sm:$0xff] %v683
          %686 = vst [vmem:[%s280 + $0x8] sm:$0xff] %v684
        $region56: #{tpu_custom_call.1} parent=35 // pred_fallthru
          _
        %s687 = sand.u32 %s155, 1
        %s688 = scalar_lea.sflag [#allocation5], %s687
        %s689 = sand.u32 %s155, 1
        %s690 = smul.addr %s689, 16
        %s691 = scalar_lea.vmem [#allocation8], %s690
        // Predicated region
        $region57: #{tpu_custom_call.1} parent=35 // pred_check
          %p692 = pneg %p165
        $region58: #{tpu_custom_call.1} parent=35 // pred_check_branch
          %694 = sbr.rel (%p692) target = $region60
        $region59: #{tpu_custom_call.1} parent=35 // pred_region
          %s695 = smul.u32 2, %s28
          %s697 = ssub.s32 256, 256
          %698 = vsyncadd %s688, %s697
          %s699 = smul.addr %s695, 2
          %s700 = sadd.s32 %s29, %s699
          %s701 = smul.addr %s700, 128
          %s702 = scalar_lea.hbm %s4, %s701
          %s703 = sshll.u32 %s691, 4
          %s704 = int_to_ptr.vmem [resolvable:$true] %s703
          %709 = dma.vmem_to_hbm [thread:$0]  %s704, 256, %s702, %s688, 128, 256, 8
        $region60: #{tpu_custom_call.1} parent=35 // pred_fallthru
          _
      $region36: #{tpu_custom_call.1} parent=5 // pred_fallthru
        _
      %p710 = scmp.le.s32.totalorder 2, %s18
      // Predicated region
      $region61: #{tpu_custom_call.1} parent=5 // pred_check
        %p711 = pneg %p710
      $region62: #{tpu_custom_call.1} parent=5 // pred_check_branch
        %713 = sbr.rel (%p711) target = $region64
      $region63: #{tpu_custom_call.1} parent=5 // pred_region
        %s714 = ssub.s32 %s18, 2
        // Predicated region
        $region65: #{tpu_custom_call.1} parent=63 // pred_check
          %p715 = pneg %p171
        $region66: #{tpu_custom_call.1} parent=63 // pred_check_branch
          %717 = sbr.rel (%p715) target = $region68
        $region67: #{tpu_custom_call.1} parent=63 // pred_region
          %s718 = sand.u32 %s156, 1
          %s719 = scalar_lea.sflag [#allocation5], %s718
          %s720 = sand.u32 %s156, 1
          %s721 = smul.addr %s720, 16
          %s722 = scalar_lea.vmem [#allocation8], %s721
          %723 = dma.done %s719, 256
        $region68: #{tpu_custom_call.1} parent=63 // pred_fallthru
          _
      $region64: #{tpu_custom_call.1} parent=5 // pred_fallthru
        _
    $region6: #{tpu_custom_call.1} parent=1 // loop_footer
      %s22 = sadd.s32 1, %s18
    $region7: #{tpu_custom_call.1} parent=1 // loop_footer_branch
      %17 = sbr.rel target = $region3
    $region8: #{tpu_custom_call.1} parent=1 // loop_exit
      _
    %724 = vsyncpa [#allocation4], 1
    %s725 = scalar_lea.sflag [#allocation4], 1
    %726 = vsyncpa %s725, 1
    %727 = vsyncpa [#allocation7], 1
    %s728 = scalar_lea.sflag [#allocation7], 1
    %729 = vsyncpa %s728, 1
    %730 = vsyncpa [#allocation5], 1
    %s731 = scalar_lea.sflag [#allocation5], 1
    %732 = vsyncpa %s731, 1

</llo_original>
